<compile_context>
chip_gen: v5e
topology: v5e:2x2
jax: 0.10.0
libtpu: 0.0.40
codegen_flags: <defaults>
</compile_context>

<pallas_src>
import functools
import math

import jax
import jax.numpy as jnp
from jax import lax
from jax.experimental import pallas as pl
from jax.experimental.pallas import tpu as pltpu


def _mhsa_kernel(*refs, head_dim, num_heads, compute_dtype, has_mask, return_attn):
    # refs = (x, w_qkv, b_qkv, wo_h, bo, [mask_bias], out, [attn], acc_scratch)
    (x_ref, wqkv_ref, bqkv_ref, wo_ref, bo_ref) = refs[:5]
    rest = refs[5:]
    if has_mask:
        mask_ref, rest = rest[0], rest[1:]
    out_ref, rest = rest[0], rest[1:]
    if return_attn:
        attn_ref, rest = rest[0], rest[1:]
    (acc_ref,) = rest

    h = pl.program_id(1)
    D = head_dim
    cd = compute_dtype

    x = x_ref[0]                        # (S, E) f32
    w_qkv = wqkv_ref[0]                 # (E, 3D) -- this head's fused QKV weights
    b_qkv = bqkv_ref[0]                 # (1, 3D)

    # Fused per-head QKV projection: one MXU pass with N = 3*D.
    qkv = jnp.dot(x.astype(cd), w_qkv.astype(cd),
                  preferred_element_type=jnp.float32) + b_qkv     # (S, 3D) f32

    scale = 1.0 / math.sqrt(float(D))
    q = qkv[:, 0 * D:1 * D] * scale     # scale q (S*D), not scores (S*S)
    k = qkv[:, 1 * D:2 * D]
    v = qkv[:, 2 * D:3 * D]

    # scores = q @ k^T without materializing a transposed copy of k.
    scores = lax.dot_general(q.astype(cd), k.astype(cd),
                             (((1,), (1,)), ((), ())),
                             preferred_element_type=jnp.float32)  # (S, S)

    if has_mask:
        scores = scores + mask_ref[0]   # (1, S) additive key bias, broadcast over rows

    # Numerically stable softmax; reciprocal goes to the EUP slot.
    m = jnp.max(scores, axis=-1, keepdims=True)
    e = jnp.exp(scores - m)
    attn = e * pl.reciprocal(jnp.sum(e, axis=-1, keepdims=True), approx=True)

    if return_attn:
        attn_ref[0, 0, :, :] = attn.astype(attn_ref.dtype)

    # Context for this head and its slice of the output projection.
    ctx = jnp.dot(attn.astype(cd), v.astype(cd),
                  preferred_element_type=jnp.float32)             # (S, D)
    partial = jnp.dot(ctx.astype(cd), wo_ref[0].astype(cd),
                      preferred_element_type=jnp.float32)         # (S, E)

    @pl.when(h == 0)
    def _init():
        acc_ref[...] = jnp.zeros_like(acc_ref)

    acc_ref[...] += partial

    @pl.when(h == num_heads - 1)
    def _finalize():
        out_ref[0] = (acc_ref[...] + bo_ref[...]).astype(out_ref.dtype)


def multi_head_self_attention(x, params, num_heads, attention_mask=None,
                              CLSorLM=0, return_attention=True,
                              compute_dtype=jnp.float32):
    """x: (B, S, E) float32. params: PyTorch-layout Linear params (W: (out,in))."""
    B, S, E = x.shape
    H = num_heads
    D = E // H
    assert H * D == E

    # Pre-slice weights per head so the kernel never reshapes/transposes
    # activations.  (in, out) layout; head h owns output columns [h*D, (h+1)*D).
    def per_head_in_out(w):                      # (E_out, E_in) -> (H, E_in, D)
        return w.T.reshape(E, H, D).transpose(1, 0, 2)

    wq_h = per_head_in_out(params['wq'])
    wk_h = per_head_in_out(params['wk'])
    wv_h = per_head_in_out(params['wv'])
    w_qkv = jnp.concatenate([wq_h, wk_h, wv_h], axis=-1)          # (H, E, 3D)

    def per_head_bias(b):
        return b.reshape(H, 1, D)
    b_qkv = jnp.concatenate([per_head_bias(params['bq']),
                             per_head_bias(params['bk']),
                             per_head_bias(params['bv'])], axis=-1)  # (H, 1, 3D)

    wo_h = params['wo'].T.reshape(H, D, E)                        # (H, D, E)
    bo = params['bo'].reshape(1, E)

    has_mask = attention_mask is not None
    if has_mask:
        if CLSorLM != 0:
            # TODO(synk): LM-style (pre-broadcast) masks not wired in.
            raise NotImplementedError("only CLS-style (B, S) padding masks supported")
        mask_bias = jnp.where(attention_mask == 0,
                              jnp.float32(-1e9),
                              jnp.float32(0.0)).reshape(B, 1, S)

    kernel = functools.partial(_mhsa_kernel, head_dim=D, num_heads=H,
                               compute_dtype=compute_dtype,
                               has_mask=has_mask, return_attn=return_attention)

    in_specs = [
        pl.BlockSpec((1, S, E), lambda b, h: (b, 0, 0)),          # x (per batch)
        pl.BlockSpec((1, E, 3 * D), lambda b, h: (h, 0, 0)),      # fused per-head W_qkv
        pl.BlockSpec((1, 1, 3 * D), lambda b, h: (h, 0, 0)),      # fused per-head b_qkv
        pl.BlockSpec((1, D, E), lambda b, h: (h, 0, 0)),          # per-head slice of Wo
        pl.BlockSpec((1, E), lambda b, h: (0, 0)),                # bo
    ]
    inputs = [x, w_qkv, b_qkv, wo_h, bo]
    if has_mask:
        in_specs.append(pl.BlockSpec((1, 1, S), lambda b, h: (b, 0, 0)))
        inputs.append(mask_bias)

    out_shapes = [jax.ShapeDtypeStruct((B, S, E), jnp.float32)]
    out_specs = [pl.BlockSpec((1, S, E), lambda b, h: (b, 0, 0))]
    if return_attention:
        out_shapes.append(jax.ShapeDtypeStruct((B, H, S, S), jnp.float32))
        out_specs.append(pl.BlockSpec((1, 1, S, S), lambda b, h: (b, h, 0, 0)))

    results = pl.pallas_call(
        kernel,
        out_shape=tuple(out_shapes),
        grid_spec=pltpu.PrefetchScalarGridSpec(
            num_scalar_prefetch=0,
            grid=(B, H),                         # reduction (head) axis last
            in_specs=in_specs,
            out_specs=out_specs,
            scratch_shapes=[pltpu.VMEM((S, E), jnp.float32)],     # output accumulator
        ),
        compiler_params=pltpu.CompilerParams(
            # Batch axis shards across TensorCores (v7x megacore); the head axis
            # accumulates into `out`, so it must stay "arbitrary".
            dimension_semantics=("parallel", "arbitrary")),
    )(*inputs)

    if return_attention:
        out, attn = results
        return out, attn
    out = results[0] if isinstance(results, (tuple, list)) else results
    return out, None


def _reference(x, params, num_heads, attention_mask=None, CLSorLM=0):
    """Pure-JAX transcription of the PyTorch forward."""
    B, S, E = x.shape
    H = num_heads
    D = E // H
    q = x @ params['wq'].T + params['bq']
    k = x @ params['wk'].T + params['bk']
    v = x @ params['wv'].T + params['bv']
    q = q.reshape(B, S, H, D).transpose(0, 2, 1, 3)
    k = k.reshape(B, S, H, D).transpose(0, 2, 1, 3)
    v = v.reshape(B, S, H, D).transpose(0, 2, 1, 3)
    scores = jnp.einsum('bhsd,bhtd->bhst', q, k) / math.sqrt(D)
    if attention_mask is not None:
        m = attention_mask[:, None, None, :] if CLSorLM == 0 else attention_mask
        scores = jnp.where(m == 0, jnp.float32(-1e9), scores)
    attn = jax.nn.softmax(scores, axis=-1)
    out = jnp.einsum('bhst,bhtd->bhsd', attn, v)
    out = out.transpose(0, 2, 1, 3).reshape(B, S, E)
    out = out @ params['wo'].T + params['bo']
    return out, attn


if __name__ == "__main__":
    B, S, E, H = 2, 8, 32, 4

    key = jax.random.PRNGKey(0)
    kx, kq, kk, kv, ko, kbq, kbk, kbv, kbo, km = jax.random.split(key, 10)

    x = jax.random.normal(kx, (B, S, E), dtype=jnp.float32)

    bound = 1.0 / math.sqrt(E)  # nn.Linear default init range
    params = {
        'wq': jax.random.uniform(kq, (E, E), jnp.float32, -bound, bound),
        'wk': jax.random.uniform(kk, (E, E), jnp.float32, -bound, bound),
        'wv': jax.random.uniform(kv, (E, E), jnp.float32, -bound, bound),
        'wo': jax.random.uniform(ko, (E, E), jnp.float32, -bound, bound),
        'bq': jax.random.uniform(kbq, (E,), jnp.float32, -bound, bound),
        'bk': jax.random.uniform(kbk, (E,), jnp.float32, -bound, bound),
        'bv': jax.random.uniform(kbv, (E,), jnp.float32, -bound, bound),
        'bo': jax.random.uniform(kbo, (E,), jnp.float32, -bound, bound),
    }

    # 1) Module semantics: f32, no mask, attention returned.
    out, attn = multi_head_self_attention(x, params, num_heads=H)
    jax.block_until_ready((out, attn))
    out_ref, attn_ref = _reference(x, params, num_heads=H)
    assert out.shape == (B, S, E) and attn.shape == (B, H, S, S)
    # tolerances loosened for the approx (EUP) softmax reciprocal
    assert jnp.allclose(out, out_ref, atol=1e-2, rtol=1e-2)
    assert jnp.allclose(attn, attn_ref, atol=1e-2, rtol=1e-2)

    # 2) CLS-style (B, S) padding mask path.
    mask = (jax.random.uniform(km, (B, S)) > 0.3).astype(jnp.int32)
    mask = mask.at[:, 0].set(1)  # at least one valid key per row
    out_m, attn_m = multi_head_self_attention(x, params, num_heads=H,
                                              attention_mask=mask, CLSorLM=0)
    jax.block_until_ready((out_m, attn_m))
    out_mr, attn_mr = _reference(x, params, num_heads=H,
                                 attention_mask=mask, CLSorLM=0)
    assert jnp.allclose(out_m, out_mr, atol=1e-2, rtol=1e-2)
    assert jnp.allclose(attn_m, attn_mr, atol=1e-2, rtol=1e-2)

    # 3) Perf path: bf16 MXU operands (f32 accumulate), attention output skipped.
    out_bf, attn_none = multi_head_self_attention(x, params, num_heads=H,
                                                  return_attention=False,
                                                  compute_dtype=jnp.bfloat16)
    jax.block_until_ready(out_bf)
    assert attn_none is None
    assert jnp.allclose(out_bf, out_ref, atol=5e-2, rtol=5e-2)

    print("KERNEL_OK")
</pallas_src>

<mosaic_0001>
module attributes {stable_mosaic.version = 11 : i64} {
  func.func @_mhsa_kernel(%arg0: i32, %arg1: i32, %arg2: memref<1x8x32xf32, #tpu.memory_space<vmem>>, %arg3: memref<1x32x24xf32, #tpu.memory_space<vmem>>, %arg4: memref<1x1x24xf32, #tpu.memory_space<vmem>>, %arg5: memref<1x8x32xf32, #tpu.memory_space<vmem>>, %arg6: memref<1x32xf32, #tpu.memory_space<vmem>>, %arg7: memref<1x8x32xf32, #tpu.memory_space<vmem>>, %arg8: memref<1x1x8x8xf32, #tpu.memory_space<vmem>>, %arg9: memref<8x32xf32, #tpu.memory_space<vmem>>) attributes {dimension_semantics = [#tpu.dimension_semantics<parallel>, #tpu.dimension_semantics<arbitrary>], iteration_bounds = array<i64: 2, 4>, scalar_prefetch = 0 : i64, scratch_operands = 1 : i64, tpu.core_type = #tpu.core_type<tc>, window_params = [{transform_indices = @transform_0, window_bounds = array<i64: 1, 8, 32>}, {transform_indices = @transform_1, window_bounds = array<i64: 1, 32, 24>}, {transform_indices = @transform_2, window_bounds = array<i64: 1, 1, 24>}, {transform_indices = @transform_3, window_bounds = array<i64: 1, 8, 32>}, {pipeline_mode = #tpu.pipeline_mode<synchronous>, transform_indices = @transform_4, window_bounds = array<i64: 1, 32>}, {transform_indices = @transform_5, window_bounds = array<i64: 1, 8, 32>}, {transform_indices = @transform_6, window_bounds = array<i64: 1, 1, 8, 8>}]} {
    %c0 = arith.constant 0 : index
    %c0_0 = arith.constant 0 : index
    %c0_1 = arith.constant 0 : index
    %0 = vector.load %arg2[%c0, %c0_0, %c0_1] : memref<1x8x32xf32, #tpu.memory_space<vmem>>, vector<1x8x32xf32>
    %1 = vector.shape_cast %0 : vector<1x8x32xf32> to vector<8x32xf32>
    %c0_2 = arith.constant 0 : index
    %c0_3 = arith.constant 0 : index
    %c0_4 = arith.constant 0 : index
    %2 = vector.load %arg3[%c0_2, %c0_3, %c0_4] : memref<1x32x24xf32, #tpu.memory_space<vmem>>, vector<1x32x24xf32>
    %3 = vector.shape_cast %2 : vector<1x32x24xf32> to vector<32x24xf32>
    %c0_5 = arith.constant 0 : index
    %c0_6 = arith.constant 0 : index
    %c0_7 = arith.constant 0 : index
    %4 = vector.load %arg4[%c0_5, %c0_6, %c0_7] : memref<1x1x24xf32, #tpu.memory_space<vmem>>, vector<1x1x24xf32>
    %5 = vector.shape_cast %4 : vector<1x1x24xf32> to vector<1x24xf32>
    %cst = arith.constant dense<0.000000e+00> : vector<8x24xf32>
    %6 = tpu.matmul %1, %3, %cst {dimension_numbers = #tpu.dot_dimension_numbers<[1], [0], [0], [1], [0, 0, 1, 1], [], []>} : vector<8x32xf32>, vector<32x24xf32>, vector<8x24xf32> -> vector<8x24xf32>
    %7 = vector.broadcast %5 : vector<1x24xf32> to vector<8x24xf32>
    %8 = arith.addf %6, %7 : vector<8x24xf32>
    %9 = vector.extract_strided_slice %8 {offsets = [0, 0], sizes = [8, 8], strides = [1, 1]} : vector<8x24xf32> to vector<8x8xf32>
    %cst_8 = arith.constant 0.353553385 : f32
    %10 = vector.broadcast %cst_8 : f32 to vector<8x8xf32>
    %11 = arith.mulf %9, %10 : vector<8x8xf32>
    %12 = vector.extract_strided_slice %8 {offsets = [0, 8], sizes = [8, 8], strides = [1, 1]} : vector<8x24xf32> to vector<8x8xf32>
    %13 = vector.extract_strided_slice %8 {offsets = [0, 16], sizes = [8, 8], strides = [1, 1]} : vector<8x24xf32> to vector<8x8xf32>
    %cst_9 = arith.constant dense<0.000000e+00> : vector<8x8xf32>
    %14 = tpu.matmul %11, %12, %cst_9 {dimension_numbers = #tpu.dot_dimension_numbers<[1], [1], [0], [0], [0, 0, 1, 0], [], []>} : vector<8x8xf32>, vector<8x8xf32>, vector<8x8xf32> -> vector<8x8xf32>
    %cst_10 = arith.constant dense<0xFF800000> : vector<8xf32>
    %15 = vector.multi_reduction <maximumf>, %14, %cst_10 [1] : vector<8x8xf32> to vector<8xf32>
    %16 = vector.shape_cast %15 : vector<8xf32> to vector<8x1xf32>
    %17 = vector.broadcast %16 : vector<8x1xf32> to vector<8x8xf32>
    %18 = arith.subf %14, %17 : vector<8x8xf32>
    %19 = math.exp %18 : vector<8x8xf32>
    %cst_11 = arith.constant dense<0.000000e+00> : vector<8xf32>
    %20 = vector.multi_reduction <add>, %19, %cst_11 [1] : vector<8x8xf32> to vector<8xf32>
    %21 = vector.shape_cast %20 : vector<8xf32> to vector<8x1xf32>
    %22 = tpu.reciprocal %21 {approx = true} : vector<8x1xf32> -> vector<8x1xf32>
    %23 = vector.broadcast %22 : vector<8x1xf32> to vector<8x8xf32>
    %24 = arith.mulf %19, %23 : vector<8x8xf32>
    %c0_12 = arith.constant 0 : index
    %c0_13 = arith.constant 0 : index
    %c0_14 = arith.constant 0 : index
    %c0_15 = arith.constant 0 : index
    %25 = vector.load %arg8[%c0_12, %c0_13, %c0_14, %c0_15] : memref<1x1x8x8xf32, #tpu.memory_space<vmem>>, vector<1x1x8x8xf32>
    %26 = vector.shape_cast %25 : vector<1x1x8x8xf32> to vector<8x8xf32>
    %27 = vector.shape_cast %24 : vector<8x8xf32> to vector<1x1x8x8xf32>
    tpu.vector_store %arg8[%c0_12, %c0_13, %c0_14, %c0_15], %27 {strides = array<i32>} : memref<1x1x8x8xf32, #tpu.memory_space<vmem>>, vector<1x1x8x8xf32>,
    %cst_16 = arith.constant dense<0.000000e+00> : vector<8x8xf32>
    %28 = tpu.matmul %24, %13, %cst_16 {dimension_numbers = #tpu.dot_dimension_numbers<[1], [0], [0], [1], [0, 0, 1, 1], [], []>} : vector<8x8xf32>, vector<8x8xf32>, vector<8x8xf32> -> vector<8x8xf32>
    %c0_17 = arith.constant 0 : index
    %c0_18 = arith.constant 0 : index
    %c0_19 = arith.constant 0 : index
    %29 = vector.load %arg5[%c0_17, %c0_18, %c0_19] : memref<1x8x32xf32, #tpu.memory_space<vmem>>, vector<1x8x32xf32>
    %30 = vector.shape_cast %29 : vector<1x8x32xf32> to vector<8x32xf32>
    %cst_20 = arith.constant dense<0.000000e+00> : vector<8x32xf32>
    %31 = tpu.matmul %28, %30, %cst_20 {dimension_numbers = #tpu.dot_dimension_numbers<[1], [0], [0], [1], [0, 0, 1, 1], [], []>} : vector<8x8xf32>, vector<8x32xf32>, vector<8x32xf32> -> vector<8x32xf32>
    %c0_i32 = arith.constant 0 : i32
    %32 = arith.cmpi eq, %arg1, %c0_i32 : i32
    %33 = arith.extui %32 : i1 to i32
    %c0_i32_21 = arith.constant 0 : i32
    %34 = arith.cmpi ne, %33, %c0_i32_21 : i32
    scf.if %34 {
      %cst_27 = arith.constant 0.000000e+00 : f32
      %41 = vector.broadcast %cst_27 : f32 to vector<8x32xf32>
      %c0_28 = arith.constant 0 : index
      %c0_29 = arith.constant 0 : index
      %42 = vector.load %arg9[%c0_28, %c0_29] : memref<8x32xf32, #tpu.memory_space<vmem>>, vector<8x32xf32>
      tpu.vector_store %arg9[%c0_28, %c0_29], %41 {strides = array<i32>} : memref<8x32xf32, #tpu.memory_space<vmem>>, vector<8x32xf32>,
    } else {
    }
    %c0_22 = arith.constant 0 : index
    %c0_23 = arith.constant 0 : index
    %35 = vector.load %arg9[%c0_22, %c0_23] : memref<8x32xf32, #tpu.memory_space<vmem>>, vector<8x32xf32>
    %36 = arith.addf %35, %31 : vector<8x32xf32>
    %c0_24 = arith.constant 0 : index
    %c0_25 = arith.constant 0 : index
    %37 = vector.load %arg9[%c0_24, %c0_25] : memref<8x32xf32, #tpu.memory_space<vmem>>, vector<8x32xf32>
    tpu.vector_store %arg9[%c0_24, %c0_25], %36 {strides = array<i32>} : memref<8x32xf32, #tpu.memory_space<vmem>>, vector<8x32xf32>,
    %c3_i32 = arith.constant 3 : i32
    %38 = arith.cmpi eq, %arg1, %c3_i32 : i32
    %39 = arith.extui %38 : i1 to i32
    %c0_i32_26 = arith.constant 0 : i32
    %40 = arith.cmpi ne, %39, %c0_i32_26 : i32
    scf.if %40 {
      %c0_27 = arith.constant 0 : index
      %c0_28 = arith.constant 0 : index
      %41 = vector.load %arg9[%c0_27, %c0_28] : memref<8x32xf32, #tpu.memory_space<vmem>>, vector<8x32xf32>
      %c0_29 = arith.constant 0 : index
      %c0_30 = arith.constant 0 : index
      %42 = vector.load %arg6[%c0_29, %c0_30] : memref<1x32xf32, #tpu.memory_space<vmem>>, vector<1x32xf32>
      %43 = vector.broadcast %42 : vector<1x32xf32> to vector<8x32xf32>
      %44 = arith.addf %41, %43 : vector<8x32xf32>
      %c0_31 = arith.constant 0 : index
      %c0_32 = arith.constant 0 : index
      %c0_33 = arith.constant 0 : index
      %45 = vector.load %arg7[%c0_31, %c0_32, %c0_33] : memref<1x8x32xf32, #tpu.memory_space<vmem>>, vector<1x8x32xf32>
      %46 = vector.shape_cast %45 : vector<1x8x32xf32> to vector<8x32xf32>
      %47 = vector.shape_cast %44 : vector<8x32xf32> to vector<1x8x32xf32>
      tpu.vector_store %arg7[%c0_31, %c0_32, %c0_33], %47 {strides = array<i32>} : memref<1x8x32xf32, #tpu.memory_space<vmem>>, vector<1x8x32xf32>,
    } else {
    }
    return
  }
  func.func @transform_0(%arg0: i32, %arg1: i32) -> (i32, i32, i32) {
    %c0_i32 = arith.constant 0 : i32
    %c0_i32_0 = arith.constant 0 : i32
    %c0_i32_1 = arith.constant 0 : i32
    return %arg0, %c0_i32, %c0_i32_0 : i32, i32, i32
  }
  func.func @transform_1(%arg0: i32, %arg1: i32) -> (i32, i32, i32) {
    %c0_i32 = arith.constant 0 : i32
    %c0_i32_0 = arith.constant 0 : i32
    %c0_i32_1 = arith.constant 0 : i32
    return %arg1, %c0_i32, %c0_i32_0 : i32, i32, i32
  }
  func.func @transform_2(%arg0: i32, %arg1: i32) -> (i32, i32, i32) {
    %c0_i32 = arith.constant 0 : i32
    %c0_i32_0 = arith.constant 0 : i32
    %c0_i32_1 = arith.constant 0 : i32
    return %arg1, %c0_i32, %c0_i32_0 : i32, i32, i32
  }
  func.func @transform_3(%arg0: i32, %arg1: i32) -> (i32, i32, i32) {
    %c0_i32 = arith.constant 0 : i32
    %c0_i32_0 = arith.constant 0 : i32
    %c0_i32_1 = arith.constant 0 : i32
    return %arg1, %c0_i32, %c0_i32_0 : i32, i32, i32
  }
  func.func @transform_4(%arg0: i32, %arg1: i32) -> (i32, i32) {
    %c0_i32 = arith.constant 0 : i32
    %c0_i32_0 = arith.constant 0 : i32
    %c0_i32_1 = arith.constant 0 : i32
    return %c0_i32, %c0_i32_0 : i32, i32
  }
  func.func @transform_5(%arg0: i32, %arg1: i32) -> (i32, i32, i32) {
    %c0_i32 = arith.constant 0 : i32
    %c0_i32_0 = arith.constant 0 : i32
    %c0_i32_1 = arith.constant 0 : i32
    return %arg0, %c0_i32, %c0_i32_0 : i32, i32, i32
  }
  func.func @transform_6(%arg0: i32, %arg1: i32) -> (i32, i32, i32, i32) {
    %c0_i32 = arith.constant 0 : i32
    %c0_i32_0 = arith.constant 0 : i32
    %c0_i32_1 = arith.constant 0 : i32
    return %arg0, %arg1, %c0_i32, %c0_i32_0 : i32, i32, i32, i32
  }
}

</mosaic_0001>

<llo_original>
// kernel: tpu_custom_call.1
$region0: #{tpu_custom_call.1}
  #allocation0 [shape = 'u32[]', space=smem, size = 0x4, offset = 0x4, fixed_abs, tag = 'smem constant byte address 0x4 - core index']
  #allocation1 [shape = 'u32[72,128]{1,0:T(1,128)}', space=vmem, size = 0x9000, scoped, tag = 'internal scratch']
  #allocation2 [shape = 'f32[8,32]{1,0:T(8,128)}', space=vmem, size = 0x1000, scoped, tag = 'scratch operand']
  %s0 = inlined_call_operand.vmem [shape: f32[2,8,32], index: 0, kind: input, shape index: {}]
  %s1 = inlined_call_operand.vmem [shape: f32[4,32,24], index: 1, kind: input, shape index: {}]
  %s2 = inlined_call_operand.vmem [shape: f32[4,1,24], index: 2, kind: input, shape index: {}]
  %s3 = inlined_call_operand.vmem [shape: f32[4,8,32], index: 3, kind: input, shape index: {}]
  %s4 = inlined_call_operand.vmem [shape: f32[1,32], index: 4, kind: input, shape index: {}]
  %s5 = inlined_call_operand.hbm [shape: f32[2,8,32], index: 5, kind: output, shape index: {0}]
  %s6 = inlined_call_operand.hbm [shape: f32[2,4,8,8], index: 6, kind: output, shape index: {1}]
  %7 = xla_tuple %s5, %s6
  %s8 = sld [smem:[#allocation0]]
  $region69: #{tpu_custom_call.1} parent=0
    _
  %s10 = ssub.s32 1, %s8
  %s11 = scalar_select 0, %s10, %s8
  $region1: #{tpu_custom_call.1} parent=0
    #allocation3 [shape = 'u8[8192]{0}', space=vmem, size = 0x2000, scoped, tag = 'output window, operand 0']
    #allocation4 [shape = 's32[2]{0}', space=sflag, size = 0x8, scoped, tag = 'scoped memory for tpu_custom_call.1']
    #allocation5 [shape = 'u8[8192]{0}', space=vmem, size = 0x2000, scoped, tag = 'output window, operand 1']
    #allocation6 [shape = 's32[2]{0}', space=sflag, size = 0x8, scoped, tag = 'scoped memory for tpu_custom_call.1']
    %12 = vsyncpa [#allocation4], 0
    %s13 = scalar_lea.sflag [#allocation4], 1
    %14 = vsyncpa %s13, 0
    %15 = vsyncpa [#allocation6], 0
    %s16 = scalar_lea.sflag [#allocation6], 1
    %17 = vsyncpa %s16, 0
    loop: start=0, step=1, limit=10
    $region2: #{tpu_custom_call.1} parent=1 // loop_pre_header
      _
    $region3: #{tpu_custom_call.1} parent=1 // loop_header
      %s19 = sphi 0, %s23
      %p20 = scmp.ge.s32.totalorder %s19, 10
      %s26 = sphi 0, %s38
      %s27 = sphi 0, %s34
      %s28 = sphi 0, %s26
      %s29 = sphi 0, %s27
      %s30 = sphi 0, %s28
      %s31 = sphi 0, %s29
      %s41 = sphi 0, %s43
      %s44 = sphi 0, %s41
      %s45 = sphi 0, %s44
      %s61 = sphi 0, %s45
      %s67 = sphi 0, %s69
      %s70 = sphi 0, %s67
      %s71 = sphi 0, %s70
      %s87 = sphi 0, %s71
      %s93 = sphi 0, %s95
      %s96 = sphi 0, %s93
      %s97 = sphi 0, %s96
      %s113 = sphi 0, %s97
      %s119 = sphi 0, %s121
      %s122 = sphi 0, %s119
      %s123 = sphi 0, %s122
      %s139 = sphi 0, %s123
      %s143 = sphi 0, %s143
      %s145 = sphi 0, %s143
      %s146 = sphi 0, %s145
      %s160 = sphi 0, %s146
      %s166 = sphi 0, %s168
      %s169 = sphi 0, %s166
      %s170 = sphi 0, %s169
      %s186 = sphi 0, %s170
      %s194 = sphi 0, %s196
      %s197 = sphi 0, %s194
      %s198 = sphi 0, %s197
      %s214 = sphi 0, %s198
    $region4: #{tpu_custom_call.1} parent=1 // loop_header_branch
      %22 = sbr.rel (%p20) target = $region8
    $region5: #{tpu_custom_call.1} parent=1 // loop_body
      %s24 = ssub.s32 %s19, 1
      %s25 = ssub.s32 %s19, 2
      %s32 = sadd.s32 1, %s27
      %p33 = scmp.ge.s32.totalorder %s32, 4
      %s34 = scalar_select %p33, 0, %s32
      %s35 = sadd.s32 1, %s26
      %s36 = scalar_select %p33, %s35, %s26
      %p37 = scmp.ge.s32.totalorder %s36, 2
      %s38 = scalar_select %p37, 0, %s36
      %s39 = ssub.s32 %s26, %s38
      %p40 = scmp.eq.s32.totalorder %s39, 0
      %s42 = sadd.s32 %s41, 1
      %s43 = scalar_select %p40, %s41, %s42
      %p46 = pneg %p40
      %p47 = scmp.eq.s32.totalorder %s19, 7
      %p48 = por %p46, %p47
      %p49 = scmp.ne.s32.totalorder %s41, %s44
      %p50 = scmp.eq.s32.totalorder %s19, 0
      %p51 = por %p49, %p50
      %p52 = scmp.ne.s32.totalorder %s41, %s44
      %p53 = scmp.eq.s32.totalorder %s24, 7
      %p54 = por %p52, %p53
      %p55 = scmp.ne.s32.totalorder %s44, %s45
      %p56 = scmp.eq.s32.totalorder %s24, 0
      %p57 = por %p55, %p56
      %p58 = scmp.ne.s32.totalorder %s44, %s45
      %p59 = scmp.eq.s32.totalorder %s25, 7
      %p60 = por %p58, %p59
      %p62 = scmp.ne.s32.totalorder %s45, %s61
      %p63 = scmp.eq.s32.totalorder %s25, 0
      %p64 = por %p62, %p63
      %s65 = ssub.s32 %s27, %s34
      %p66 = scmp.eq.s32.totalorder %s65, 0
      %s68 = sadd.s32 %s67, 1
      %s69 = scalar_select %p66, %s67, %s68
      %p72 = pneg %p66
      %p73 = scmp.eq.s32.totalorder %s19, 7
      %p74 = por %p72, %p73
      %p75 = scmp.ne.s32.totalorder %s67, %s70
      %p76 = scmp.eq.s32.totalorder %s19, 0
      %p77 = por %p75, %p76
      %p78 = scmp.ne.s32.totalorder %s67, %s70
      %p79 = scmp.eq.s32.totalorder %s24, 7
      %p80 = por %p78, %p79
      %p81 = scmp.ne.s32.totalorder %s70, %s71
      %p82 = scmp.eq.s32.totalorder %s24, 0
      %p83 = por %p81, %p82
      %p84 = scmp.ne.s32.totalorder %s70, %s71
      %p85 = scmp.eq.s32.totalorder %s25, 7
      %p86 = por %p84, %p85
      %p88 = scmp.ne.s32.totalorder %s71, %s87
      %p89 = scmp.eq.s32.totalorder %s25, 0
      %p90 = por %p88, %p89
      %s91 = ssub.s32 %s27, %s34
      %p92 = scmp.eq.s32.totalorder %s91, 0
      %s94 = sadd.s32 %s93, 1
      %s95 = scalar_select %p92, %s93, %s94
      %p98 = pneg %p92
      %p99 = scmp.eq.s32.totalorder %s19, 7
      %p100 = por %p98, %p99
      %p101 = scmp.ne.s32.totalorder %s93, %s96
      %p102 = scmp.eq.s32.totalorder %s19, 0
      %p103 = por %p101, %p102
      %p104 = scmp.ne.s32.totalorder %s93, %s96
      %p105 = scmp.eq.s32.totalorder %s24, 7
      %p106 = por %p104, %p105
      %p107 = scmp.ne.s32.totalorder %s96, %s97
      %p108 = scmp.eq.s32.totalorder %s24, 0
      %p109 = por %p107, %p108
      %p110 = scmp.ne.s32.totalorder %s96, %s97
      %p111 = scmp.eq.s32.totalorder %s25, 7
      %p112 = por %p110, %p111
      %p114 = scmp.ne.s32.totalorder %s97, %s113
      %p115 = scmp.eq.s32.totalorder %s25, 0
      %p116 = por %p114, %p115
      %s117 = ssub.s32 %s27, %s34
      %p118 = scmp.eq.s32.totalorder %s117, 0
      %s120 = sadd.s32 %s119, 1
      %s121 = scalar_select %p118, %s119, %s120
      %p124 = pneg %p118
      %p125 = scmp.eq.s32.totalorder %s19, 7
      %p126 = por %p124, %p125
      %p127 = scmp.ne.s32.totalorder %s119, %s122
      %p128 = scmp.eq.s32.totalorder %s19, 0
      %p129 = por %p127, %p128
      %p130 = scmp.ne.s32.totalorder %s119, %s122
      %p131 = scmp.eq.s32.totalorder %s24, 7
      %p132 = por %p130, %p131
      %p133 = scmp.ne.s32.totalorder %s122, %s123
      %p134 = scmp.eq.s32.totalorder %s24, 0
      %p135 = por %p133, %p134
      %p136 = scmp.ne.s32.totalorder %s122, %s123
      %p137 = scmp.eq.s32.totalorder %s25, 7
      %p138 = por %p136, %p137
      %p140 = scmp.ne.s32.totalorder %s123, %s139
      %p141 = scmp.eq.s32.totalorder %s25, 0
      %p142 = por %p140, %p141
      %s144 = sadd.s32 %s143, 1
      %p147 = scmp.eq.s32.totalorder %s19, 7
      %p148 = scmp.ne.s32.totalorder %s143, %s145
      %p149 = scmp.eq.s32.totalorder %s19, 0
      %p150 = por %p148, %p149
      %p151 = scmp.ne.s32.totalorder %s143, %s145
      %p152 = scmp.eq.s32.totalorder %s24, 7
      %p153 = por %p151, %p152
      %p154 = scmp.ne.s32.totalorder %s145, %s146
      %p155 = scmp.eq.s32.totalorder %s24, 0
      %p156 = por %p154, %p155
      %p157 = scmp.ne.s32.totalorder %s145, %s146
      %p158 = scmp.eq.s32.totalorder %s25, 7
      %p159 = por %p157, %p158
      %p161 = scmp.ne.s32.totalorder %s146, %s160
      %p162 = scmp.eq.s32.totalorder %s25, 0
      %p163 = por %p161, %p162
      %s164 = ssub.s32 %s26, %s38
      %p165 = scmp.eq.s32.totalorder %s164, 0
      %s167 = sadd.s32 %s166, 1
      %s168 = scalar_select %p165, %s166, %s167
      %p171 = pneg %p165
      %p172 = scmp.eq.s32.totalorder %s19, 7
      %p173 = por %p171, %p172
      %p174 = scmp.ne.s32.totalorder %s166, %s169
      %p175 = scmp.eq.s32.totalorder %s19, 0
      %p176 = por %p174, %p175
      %p177 = scmp.ne.s32.totalorder %s166, %s169
      %p178 = scmp.eq.s32.totalorder %s24, 7
      %p179 = por %p177, %p178
      %p180 = scmp.ne.s32.totalorder %s169, %s170
      %p181 = scmp.eq.s32.totalorder %s24, 0
      %p182 = por %p180, %p181
      %p183 = scmp.ne.s32.totalorder %s169, %s170
      %p184 = scmp.eq.s32.totalorder %s25, 7
      %p185 = por %p183, %p184
      %p187 = scmp.ne.s32.totalorder %s170, %s186
      %p188 = scmp.eq.s32.totalorder %s25, 0
      %p189 = por %p187, %p188
      %s190 = ssub.s32 %s26, %s38
      %s191 = ssub.s32 %s27, %s34
      %s192 = sor.u32 %s190, %s191
      %p193 = scmp.eq.s32.totalorder %s192, 0
      %s195 = sadd.s32 %s194, 1
      %s196 = scalar_select %p193, %s194, %s195
      %p199 = pneg %p193
      %p200 = scmp.eq.s32.totalorder %s19, 7
      %p201 = por %p199, %p200
      %p202 = scmp.ne.s32.totalorder %s194, %s197
      %p203 = scmp.eq.s32.totalorder %s19, 0
      %p204 = por %p202, %p203
      %p205 = scmp.ne.s32.totalorder %s194, %s197
      %p206 = scmp.eq.s32.totalorder %s24, 7
      %p207 = por %p205, %p206
      %p208 = scmp.ne.s32.totalorder %s197, %s198
      %p209 = scmp.eq.s32.totalorder %s24, 0
      %p210 = por %p208, %p209
      %p211 = scmp.ne.s32.totalorder %s197, %s198
      %p212 = scmp.eq.s32.totalorder %s25, 7
      %p213 = por %p211, %p212
      %p215 = scmp.ne.s32.totalorder %s198, %s214
      %p216 = scmp.eq.s32.totalorder %s25, 0
      %p217 = por %p215, %p216
      %p218 = scmp.le.s32.totalorder 1, %s19
      %p219 = scmp.lt.s32.totalorder %s19, 9
      %p220 = pnand %p218, %p219
      %p221 = pneg %p220
      // Predicated region
      $region9: #{tpu_custom_call.1} parent=5 // pred_check
        _
      $region10: #{tpu_custom_call.1} parent=5 // pred_check_branch
        %223 = sbr.rel (%p220) target = $region12
      $region11: #{tpu_custom_call.1} parent=5 // pred_region
        %s224 = ssub.s32 %s19, 1
        // Predicated region
        $region13: #{tpu_custom_call.1} parent=11 // pred_check
          %p225 = pneg %p156
        $region14: #{tpu_custom_call.1} parent=11 // pred_check_branch
          %227 = sbr.rel (%p225) target = $region16
        $region15: #{tpu_custom_call.1} parent=11 // pred_region
          _
        $region16: #{tpu_custom_call.1} parent=11 // pred_fallthru
          _
      $region12: #{tpu_custom_call.1} parent=5 // pred_fallthru
        _
      %p228 = scmp.lt.s32.totalorder %s19, 8
      // Predicated region
      $region17: #{tpu_custom_call.1} parent=5 // pred_check
        %p229 = pneg %p228
      $region18: #{tpu_custom_call.1} parent=5 // pred_check_branch
        %231 = sbr.rel (%p229) target = $region20
      $region19: #{tpu_custom_call.1} parent=5 // pred_region
        // Predicated region
        $region21: #{tpu_custom_call.1} parent=19 // pred_check
          %p232 = pneg %p51
        $region22: #{tpu_custom_call.1} parent=19 // pred_check_branch
          %234 = sbr.rel (%p232) target = $region24
        $region23: #{tpu_custom_call.1} parent=19 // pred_region
          %p235 = scmp.lt.s32.totalorder %s26, 1
          %s236 = scalar_select %p235, %s26, 1
          %s237 = smul.addr %s236, 8
          %s238 = scalar_lea.vmem %s0, %s237
        $region24: #{tpu_custom_call.1} parent=19 // pred_fallthru
          _
        // Predicated region
        $region25: #{tpu_custom_call.1} parent=19 // pred_check
          %p239 = pneg %p77
        $region26: #{tpu_custom_call.1} parent=19 // pred_check_branch
          %241 = sbr.rel (%p239) target = $region28
        $region27: #{tpu_custom_call.1} parent=19 // pred_region
          %p242 = scmp.lt.s32.totalorder %s27, 3
          %s243 = scalar_select %p242, %s27, 3
          %s244 = smul.addr %s243, 4
          %s245 = smul.addr %s244, 8
          %s246 = scalar_lea.vmem %s1, %s245
        $region28: #{tpu_custom_call.1} parent=19 // pred_fallthru
          _
        // Predicated region
        $region29: #{tpu_custom_call.1} parent=19 // pred_check
          %p247 = pneg %p103
        $region30: #{tpu_custom_call.1} parent=19 // pred_check_branch
          %249 = sbr.rel (%p247) target = $region32
        $region31: #{tpu_custom_call.1} parent=19 // pred_region
          %p250 = scmp.lt.s32.totalorder %s27, 3
          %s251 = scalar_select %p250, %s27, 3
          %s252 = scalar_lea.vmem %s2, %s251
        $region32: #{tpu_custom_call.1} parent=19 // pred_fallthru
          _
        // Predicated region
        $region33: #{tpu_custom_call.1} parent=19 // pred_check
          %p253 = pneg %p129
        $region34: #{tpu_custom_call.1} parent=19 // pred_check_branch
          %255 = sbr.rel (%p253) target = $region36
        $region35: #{tpu_custom_call.1} parent=19 // pred_region
          %p256 = scmp.lt.s32.totalorder %s27, 3
          %s257 = scalar_select %p256, %s27, 3
          %s258 = smul.addr %s257, 8
          %s259 = scalar_lea.vmem %s3, %s258
        $region36: #{tpu_custom_call.1} parent=19 // pred_fallthru
          _
      $region20: #{tpu_custom_call.1} parent=5 // pred_fallthru
        _
      %p260 = scmp.le.s32.totalorder 1, %s19
      %p261 = scmp.lt.s32.totalorder %s19, 9
      %p262 = pnand %p260, %p261
      %p263 = pneg %p262
      // Predicated region
      $region37: #{tpu_custom_call.1} parent=5 // pred_check
        _
      $region38: #{tpu_custom_call.1} parent=5 // pred_check_branch
        %265 = sbr.rel (%p262) target = $region40
      $region39: #{tpu_custom_call.1} parent=5 // pred_region
        %s266 = ssub.s32 %s19, 1
        %p267 = scmp.lt.s32.totalorder %s28, 1
        %s268 = scalar_select %p267, %s28, 1
        %s269 = smul.addr %s268, 8
        %s270 = scalar_lea.vmem %s0, %s269
        %p271 = pneg %p57
        %p272 = pneg %p54
        %p273 = scmp.lt.s32.totalorder %s29, 3
        %s274 = scalar_select %p273, %s29, 3
        %s275 = smul.addr %s274, 4
        %s276 = smul.addr %s275, 8
        %s277 = scalar_lea.vmem %s1, %s276
        %p278 = pneg %p83
        %p279 = pneg %p80
        %p280 = scmp.lt.s32.totalorder %s29, 3
        %s281 = scalar_select %p280, %s29, 3
        %s282 = scalar_lea.vmem %s2, %s281
        %p283 = pneg %p109
        %p284 = pneg %p106
        %p285 = scmp.lt.s32.totalorder %s29, 3
        %s286 = scalar_select %p285, %s29, 3
        %s287 = smul.addr %s286, 8
        %s288 = scalar_lea.vmem %s3, %s287
        %p289 = pneg %p135
        %p290 = pneg %p132
        %p291 = pneg %p156
        %p292 = pneg %p153
        %p293 = pneg %p182
        %p294 = pneg %p179
        %s295 = sand.u32 %s169, 1
        %s296 = scalar_lea.sflag [#allocation4], %s295
        %s297 = sand.u32 %s169, 1
        %s298 = smul.addr %s297, 8
        %s299 = scalar_lea.vmem [#allocation3], %s298
        %p300 = pneg %p210
        %p301 = pneg %p207
        %s302 = sand.u32 %s197, 1
        %s303 = scalar_lea.sflag [#allocation6], %s302
        %s304 = sand.u32 %s197, 1
        %s305 = smul.addr %s304, 8
        %s306 = scalar_lea.vmem [#allocation5], %s305
        %p307 = scmp.lt.s32.totalorder %s28, 1
        %s308 = scalar_select %p307, %s28, 1
        %s309 = smul.addr %s308, 8
        %s310 = scalar_lea.vmem %s0, %s309
        %p311 = scmp.lt.s32.totalorder %s29, 3
        %s312 = scalar_select %p311, %s29, 3
        %s313 = smul.addr %s312, 4
        %s314 = smul.addr %s313, 8
        %s315 = scalar_lea.vmem %s1, %s314
        %p316 = scmp.lt.s32.totalorder %s29, 3
        %s317 = scalar_select %p316, %s29, 3
        %s318 = scalar_lea.vmem %s2, %s317
        %p319 = scmp.lt.s32.totalorder %s29, 3
        %s320 = scalar_select %p319, %s29, 3
        %s321 = smul.addr %s320, 8
        %s322 = scalar_lea.vmem %s3, %s321
        %v323 = vld [vmem:[%s310] sm:$0xff]
        %v324 = vld [vmem:[%s315] sm:$0xff]
        %v325 = vld [vmem:[%s315 + $0x8] sm:$0xff]
        %v326 = vld [vmem:[%s315 + $0x10] sm:$0xff]
        %v327 = vld [vmem:[%s315 + $0x18] sm:$0xff]
        %v328 = vld [vmem:[%s318] sm:$0x1]
        %v330 = vperm.slane %v328, 0
        %vm332 = vcmask 261120
        %v334 = vsel %vm332, %v323, 0
        %336 = vmatpush.msra.mxu0 0.0
        %337 = vmatpush.msra.mxu0 0.0
        %338 = vmatpush.msra.mxu0 0.0
        %339 = vmatpush.msra.mxu0 0.0
        %340 = vmatpush.msra.mxu0 0.0
        %341 = vmatpush.msra.mxu0 0.0
        %342 = vmatpush.msra.mxu0 0.0
        %343 = vmatpush.msra.mxu0 0.0
        %344 = vmatpush.msra.mxu0 0.0
        %345 = vmatpush.msra.mxu0 0.0
        %346 = vmatpush.msra.mxu0 0.0
        %347 = vmatpush.msra.mxu0 0.0
        %348 = vmatpush.msra.mxu0 %v327
        %349 = vmatpush.msra.mxu0 %v326
        %350 = vmatpush.msra.mxu0 %v325
        %351 = vmatpush.msra.mxu0 %v324
        %352 = vmatmul.f32.gmra.mxu0 %v334
        %v353 = vpop.f32.mrf.mxu0
        %v354 = vadd.f32 %v330, %v353
        %355 = vdwg.mxu0
        %v356 = vmul.f32 %v354, 0.35355338
        %358 = vrot.lane.b32.xlu0 %v354, 120
        %v359 = vpop.permute.xlu0 %358
        %vm360 = vcmask 64512
        %v362 = vsel %vm360, %v356, 0
        %v364 = vsel %vm360, %v359, 0
        %366 = vmatpush.xpose.msra.mxu0 0.0
        %367 = vmatpush.xpose.msra.mxu0 0.0
        %368 = vmatpush.xpose.msra.mxu0 0.0
        %369 = vmatpush.xpose.msra.mxu0 0.0
        %370 = vmatpush.xpose.msra.mxu0 0.0
        %371 = vmatpush.xpose.msra.mxu0 0.0
        %372 = vmatpush.xpose.msra.mxu0 0.0
        %373 = vmatpush.xpose.msra.mxu0 0.0
        %374 = vmatpush.xpose.msra.mxu0 0.0
        %375 = vmatpush.xpose.msra.mxu0 0.0
        %376 = vmatpush.xpose.msra.mxu0 0.0
        %377 = vmatpush.xpose.msra.mxu0 0.0
        %378 = vmatpush.xpose.msra.mxu0 0.0
        %379 = vmatpush.xpose.msra.mxu0 0.0
        %380 = vmatpush.xpose.msra.mxu0 0.0
        %381 = vmatpush.xpose.msra.mxu0 %v364
        %382 = vmatmul.f32.gmra.mxu0 %v362
        %v383 = vpop.f32.mrf.mxu0
        %v384 = vadd.f32 0.0, %v383
        %385 = vdwg.mxu0
        %v386 = vsel %vm360, %v384, -inf
        %387 = vmax.xlane.f32.xlu0 %v386
        %v388 = vpop.xlane.xlu0 %387
        %v389 = vsub.f32 %v384, %v388
        %v390 = vmul.f32 %v389, 1.442695
        %v391 = vpow.pop %v390
        %v392 = vsel %vm360, %v391, 0.0
        %393 = vadd.xlane.f32.xlu0 %v392
        %v394 = vpop.xlane.xlu0 %393
        %v395 = vrcp.pop %v394
        %v396 = vmul.f32 %v391, %v395
        %397 = vst.msk [vmem:[%s306] sm:$0xff] %vm360, %v396
        %398 = vrot.lane.b32.xlu0 %v354, 112
        %v399 = vpop.permute.xlu0 %398
        %v402 = vsel %vm360, %v396, 0
        %404 = vmatpush.msra.mxu0 0.0
        %405 = vmatpush.msra.mxu0 0.0
        %406 = vmatpush.msra.mxu0 0.0
        %407 = vmatpush.msra.mxu0 0.0
        %408 = vmatpush.msra.mxu0 0.0
        %409 = vmatpush.msra.mxu0 0.0
        %410 = vmatpush.msra.mxu0 0.0
        %411 = vmatpush.msra.mxu0 0.0
        %412 = vmatpush.msra.mxu0 0.0
        %413 = vmatpush.msra.mxu0 0.0
        %414 = vmatpush.msra.mxu0 0.0
        %415 = vmatpush.msra.mxu0 0.0
        %416 = vmatpush.msra.mxu0 0.0
        %417 = vmatpush.msra.mxu0 0.0
        %418 = vmatpush.msra.mxu0 0.0
        %419 = vmatpush.msra.mxu0 %v399
        %420 = vmatmul.f32.gmra.mxu0 %v402
        %v421 = vpop.f32.mrf.mxu0
        %v422 = vadd.f32 0.0, %v421
        %423 = vdwg.mxu0
        %v424 = vld [vmem:[%s322] sm:$0xff]
        %v426 = vsel %vm360, %v422, 0
        %428 = vmatpush.msra.mxu0 0.0
        %429 = vmatpush.msra.mxu0 0.0
        %430 = vmatpush.msra.mxu0 0.0
        %431 = vmatpush.msra.mxu0 0.0
        %432 = vmatpush.msra.mxu0 0.0
        %433 = vmatpush.msra.mxu0 0.0
        %434 = vmatpush.msra.mxu0 0.0
        %435 = vmatpush.msra.mxu0 0.0
        %436 = vmatpush.msra.mxu0 0.0
        %437 = vmatpush.msra.mxu0 0.0
        %438 = vmatpush.msra.mxu0 0.0
        %439 = vmatpush.msra.mxu0 0.0
        %440 = vmatpush.msra.mxu0 0.0
        %441 = vmatpush.msra.mxu0 0.0
        %442 = vmatpush.msra.mxu0 0.0
        %443 = vmatpush.msra.mxu0 %v424
        %444 = vmatmul.f32.gmra.mxu0 %v426
        %v445 = vpop.f32.mrf.mxu0
        %v446 = vadd.f32 0.0, %v445
        %447 = vdwg.mxu0
        %p448 = scmp.eq.s32.totalorder %s29, 0
        // Predicated region
        $region41: #{tpu_custom_call.1} parent=39 // pred_check
          %p449 = pneg %p448
        $region42: #{tpu_custom_call.1} parent=39 // pred_check_branch
          %451 = sbr.rel (%p449) target = $region44
        $region43: #{tpu_custom_call.1} parent=39 // pred_region
          %452 = vst.msk [vmem:[#allocation2] sm:$0xff] %vm332, 0.0
        $region44: #{tpu_custom_call.1} parent=39 // pred_fallthru
          _
        %v453 = vld [vmem:[#allocation2] sm:$0xff]
        %v454 = vadd.f32 %v453, %v446
        %455 = vst.msk [vmem:[#allocation2] sm:$0xff] %vm332, %v454
        %p456 = scmp.eq.s32.totalorder %s29, 3
        // Predicated region
        $region45: #{tpu_custom_call.1} parent=39 // pred_check
          %p457 = pneg %p456
        $region46: #{tpu_custom_call.1} parent=39 // pred_check_branch
          %459 = sbr.rel (%p457) target = $region48
        $region47: #{tpu_custom_call.1} parent=39 // pred_region
          %v460 = vld [vmem:[#allocation2] sm:$0xff]
          %v461 = vld [vmem:[%s4] sm:$0x1]
          %v463 = vperm.slane %v461, 0
          %v465 = vadd.f32 %v460, %v463
          %466 = vst.msk [vmem:[%s299] sm:$0xff] %vm332, %v465
        $region48: #{tpu_custom_call.1} parent=39 // pred_fallthru
          _
        %s467 = sand.u32 %s169, 1
        %s468 = scalar_lea.sflag [#allocation4], %s467
        %s469 = sand.u32 %s169, 1
        %s470 = smul.addr %s469, 8
        %s471 = scalar_lea.vmem [#allocation3], %s470
        %s472 = sand.u32 %s197, 1
        %s473 = scalar_lea.sflag [#allocation6], %s472
        %s474 = sand.u32 %s197, 1
        %s475 = smul.addr %s474, 8
        %s476 = scalar_lea.vmem [#allocation5], %s475
        // Predicated region
        $region49: #{tpu_custom_call.1} parent=39 // pred_check
          %p477 = pneg %p179
        $region50: #{tpu_custom_call.1} parent=39 // pred_check_branch
          %479 = sbr.rel (%p477) target = $region52
        $region51: #{tpu_custom_call.1} parent=39 // pred_region
          %481 = vsyncadd %s468, 0
          %s482 = smul.addr %s28, 8
          %s483 = scalar_lea.hbm %s5, %s482
          %s485 = sshll.u32 %s471, 4
          %s486 = int_to_ptr.vmem [resolvable:$true] %s485
          %s487 = sshll.u32 %s483, 4
          %s488 = int_to_ptr.hbm [resolvable:$true] %s487
          %490 = dma.vmem_to_hbm [thread:$0]  %s486, 128, %s488, %s468
        $region52: #{tpu_custom_call.1} parent=39 // pred_fallthru
          _
        // Predicated region
        $region53: #{tpu_custom_call.1} parent=39 // pred_check
          %p491 = pneg %p207
        $region54: #{tpu_custom_call.1} parent=39 // pred_check_branch
          %493 = sbr.rel (%p491) target = $region56
        $region55: #{tpu_custom_call.1} parent=39 // pred_region
          %495 = vsyncadd %s473, 0
          %s496 = smul.addr %s28, 4
          %s497 = sadd.s32 %s29, %s496
          %s498 = smul.addr %s497, 8
          %s499 = scalar_lea.hbm %s6, %s498
          %s501 = sshll.u32 %s476, 4
          %s502 = int_to_ptr.vmem [resolvable:$true] %s501
          %s503 = sshll.u32 %s499, 4
          %s504 = int_to_ptr.hbm [resolvable:$true] %s503
          %506 = dma.vmem_to_hbm [thread:$0]  %s502, 128, %s504, %s473
        $region56: #{tpu_custom_call.1} parent=39 // pred_fallthru
          _
      $region40: #{tpu_custom_call.1} parent=5 // pred_fallthru
        _
      %p507 = scmp.le.s32.totalorder 2, %s19
      // Predicated region
      $region57: #{tpu_custom_call.1} parent=5 // pred_check
        %p508 = pneg %p507
      $region58: #{tpu_custom_call.1} parent=5 // pred_check_branch
        %510 = sbr.rel (%p508) target = $region60
      $region59: #{tpu_custom_call.1} parent=5 // pred_region
        %s511 = ssub.s32 %s19, 2
        // Predicated region
        $region61: #{tpu_custom_call.1} parent=59 // pred_check
          %p512 = pneg %p185
        $region62: #{tpu_custom_call.1} parent=59 // pred_check_branch
          %514 = sbr.rel (%p512) target = $region64
        $region63: #{tpu_custom_call.1} parent=59 // pred_region
          %s515 = sand.u32 %s170, 1
          %s516 = scalar_lea.sflag [#allocation4], %s515
          %s517 = sand.u32 %s170, 1
          %s518 = smul.addr %s517, 8
          %s519 = scalar_lea.vmem [#allocation3], %s518
          %521 = dma.done %s516, 128
        $region64: #{tpu_custom_call.1} parent=59 // pred_fallthru
          _
        // Predicated region
        $region65: #{tpu_custom_call.1} parent=59 // pred_check
          %p522 = pneg %p213
        $region66: #{tpu_custom_call.1} parent=59 // pred_check_branch
          %524 = sbr.rel (%p522) target = $region68
        $region67: #{tpu_custom_call.1} parent=59 // pred_region
          %s525 = sand.u32 %s198, 1
          %s526 = scalar_lea.sflag [#allocation6], %s525
          %s527 = sand.u32 %s198, 1
          %s528 = smul.addr %s527, 8
          %s529 = scalar_lea.vmem [#allocation5], %s528
          %531 = dma.done %s526, 128
        $region68: #{tpu_custom_call.1} parent=59 // pred_fallthru
          _
      $region60: #{tpu_custom_call.1} parent=5 // pred_fallthru
        _
    $region6: #{tpu_custom_call.1} parent=1 // loop_footer
      %s23 = sadd.s32 1, %s19
    $region7: #{tpu_custom_call.1} parent=1 // loop_footer_branch
      %18 = sbr.rel target = $region3
    $region8: #{tpu_custom_call.1} parent=1 // loop_exit
      _
    %532 = vsyncpa [#allocation4], 1
    %s533 = scalar_lea.sflag [#allocation4], 1
    %534 = vsyncpa %s533, 1
    %535 = vsyncpa [#allocation6], 1
    %s536 = scalar_lea.sflag [#allocation6], 1
    %537 = vsyncpa %s536, 1

</llo_original>
